<compile_context>
chip_gen: v6e
topology: v6e:2x2x1
jax: 0.10.0
libtpu: 0.0.40
codegen_flags: <defaults>
</compile_context>

<pallas_src>
import math

import jax
import jax.numpy as jnp
from jax.experimental import pallas as pl
from jax.experimental.pallas import tpu as pltpu


def _make_fm_kernel(offsets):
    """Kernel factory; the (static) per-field vocabulary offsets are closed over so
    the offset add folds into the iota compare (no wrapper-side HBM pass)."""
    offs = tuple(int(o) for o in offsets)

    def kernel(idx_ref, tbl_ref, bias_ref, out_ref):
        # idx_ref : (F, B_T) int32  raw field indices, batch on lanes
        # tbl_ref : (D+2, V)        fused table rows: [emb.T ; sq_norm ; lin.T]
        # bias_ref: (1, 1)   f32    SMEM scalar
        # out_ref : (1, B_T) f32    sigmoid(FM(x)), lane-dense
        idx = idx_ref[...]
        F, B_T = idx.shape
        Wp2, V = tbl_ref.shape
        D = Wp2 - 2

        # Multi-hot over the (offset-disjoint) vocabulary, batch on lanes.  Fields
        # are disjoint after the offset shift, so bool OR is exact; one cast at the
        # end instead of F float converts + adds.
        # NOTE: an out-of-range index silently contributes a zero row
        # (PyTorch nn.Embedding would raise instead).
        vocab_iota = jax.lax.broadcasted_iota(jnp.int32, (V, B_T), 0)
        hit = vocab_iota == (idx[0:1, :] + offs[0])
        for f in range(1, F):                         # F is tiny; static unroll
            hit = jnp.logical_or(hit, vocab_iota == (idx[f:f + 1, :] + offs[f]))
        mh = hit.astype(jnp.float32)
        tbl = tbl_ref[...]
        if tbl.dtype != jnp.float32:
            mh = mh.astype(tbl.dtype)                 # bf16 MXU path on v6e/v7x

        # Single fused MXU matmul: (D+2, V) @ (V, B_T) -> (D+2, B_T), f32 accum.
        fused = jnp.dot(tbl, mh, preferred_element_type=jnp.float32)
        sum_e = fused[:D, :]                          # sum_f e_f            (D, B_T)
        sq_sum = fused[D:D + 1, :]                    # sum_f ||e_f||^2      (1, B_T)
        lin_sum = fused[D + 1:D + 2, :]               # sum_f lin_f          (1, B_T)

        interaction = 0.5 * (jnp.sum(sum_e * sum_e, axis=0, keepdims=True) - sq_sum)
        logit = lin_sum + interaction + bias_ref[0, 0]
        out_ref[...] = jax.nn.sigmoid(logit)          # lane-dense (1, B_T) store

    return kernel


def make_fm_table(lin_w, emb_w, *, compute_dtype=jnp.bfloat16):
    """Build the fused (D+2, V) table ONCE per weight update (hoisted out of the
    per-call path).  Rows: [emb.T (D) ; squared-norm (1, f32-precomputed) ; lin (1)].
    Use compute_dtype=jnp.float32 on v5e (no bf16 VPU) or for bit-exact checks."""
    emb_f32 = emb_w.astype(jnp.float32)
    sq_norm = jnp.sum(emb_f32 * emb_f32, axis=1, keepdims=True)          # (V, 1)
    tbl = jnp.concatenate([emb_f32, sq_norm, lin_w.astype(jnp.float32)], axis=1).T
    return tbl.astype(compute_dtype)                                      # (D+2, V)


def _round_down(x, m):
    return x // m * m


def _batch_tiling(B, batch_tile):
    assert batch_tile % 128 == 0, "batch_tile must be a multiple of 128"
    if B < 256:
        return B, 1                                   # single full-extent tile
    # >= 2 lane-dense (128-multiple) tiles so the parallel axis feeds both v7x TCs.
    b_t = min(batch_tile, max(128, _round_down(B // 2, 128)))
    return b_t, pl.cdiv(B, b_t)


def fm_forward(x, table, bias, offsets, *, batch_tile=2048):
    """x: (B, F) int field indices; table: (D+2, V) from make_fm_table; bias: (1,).
    Returns (B,) float32, matching the PyTorch module's forward."""
    B, F = x.shape
    assert len(offsets) == F
    Wp2, V = table.shape
    D = Wp2 - 2

    idx = x.astype(jnp.int32).T                       # (F, B): batch on the lane axis
    b_t, n_tiles = _batch_tiling(B, batch_tile)
    b_pad = b_t * n_tiles                             # ragged tail handled by Pallas'
                                                      # padded last input block; those
                                                      # output lanes are sliced off.

    kernel = _make_fm_kernel(offsets)
    flops = 2 * Wp2 * V * b_pad + (F + 1) * V * b_pad + 3 * D * b_pad
    bytes_accessed = (idx.size * 4 + table.size * table.dtype.itemsize + b_pad * 4 + 4)

    out = pl.pallas_call(
        kernel,
        out_shape=jax.ShapeDtypeStruct((1, b_pad), jnp.float32),
        grid=(n_tiles,),
        in_specs=[
            pl.BlockSpec((F, b_t), lambda i: (0, i)),            # indices (batch-tiled)
            # Resident fused table (constant index_map).
            # TODO(synk): for production vocabularies (2x-buffered table approaching
            # v7x's 64 MiB VMEM) single-buffer it or switch to a scalar-prefetch /
            # DMA row-gather with the table left in HBM (memory_space=pl.ANY).
            pl.BlockSpec((Wp2, V), lambda i: (0, 0)),
            pl.BlockSpec((1, 1), lambda i: (0, 0),
                         memory_space=pltpu.MemorySpace.SMEM),   # bias scalar
        ],
        out_specs=pl.BlockSpec((1, b_t), lambda i: (0, i)),      # lane-dense output
        compiler_params=pltpu.CompilerParams(
            dimension_semantics=("parallel",),                   # megacore sharding
            vmem_limit_bytes=64 * 1024 * 1024),
        cost_estimate=pl.CostEstimate(flops=int(flops),
                                      transcendentals=int(b_pad),
                                      bytes_accessed=int(bytes_accessed)),
    )(idx, table, bias.reshape(1, 1).astype(jnp.float32))
    return out[0, :B]


def fm_reference(x, offsets, lin_w, emb_w, bias):
    """Pure-JAX reference mirroring the PyTorch forward exactly (f32)."""
    tmp = x + offsets[None, :]                                  # (B, F)
    linear_part = jnp.sum(lin_w[tmp], axis=1) + bias            # (B, 1)
    e = emb_w[tmp]                                              # (B, F, D)
    square_of_sum = jnp.sum(e, axis=1) ** 2                     # (B, D)
    sum_of_square = jnp.sum(e ** 2, axis=1)                     # (B, D)
    out = linear_part + 0.5 * jnp.sum(square_of_sum - sum_of_square,
                                      axis=1, keepdims=True)
    return jax.nn.sigmoid(out[:, 0])


if __name__ == "__main__":
    # Module config (synthetic, deterministic).
    feature_fields = (3, 4, 5)             # field cardinalities
    embed_dim = 32

    vocab = sum(feature_fields) + 1        # 13
    offsets = (0, *[int(v) for v in jnp.cumsum(jnp.asarray(feature_fields))[:-1]])
    offsets_arr = jnp.asarray(offsets, dtype=jnp.int32)

    key = jax.random.PRNGKey(0)
    k_lin, k_emb, k_x1, k_x2, k_x3 = jax.random.split(key, 5)

    # nn.Embedding default init: N(0, 1); xavier_uniform_ for the FM embedding.
    lin_w = jax.random.normal(k_lin, (vocab, 1), dtype=jnp.float32)
    bound = math.sqrt(6.0 / (vocab + embed_dim))
    emb_w = jax.random.uniform(k_emb, (vocab, embed_dim),
                               minval=-bound, maxval=bound, dtype=jnp.float32)
    bias = jnp.zeros((1,), dtype=jnp.float32)

    # Fused tables built ONCE and reused across calls (amortized to ~zero).
    tbl_f32 = make_fm_table(lin_w, emb_w, compute_dtype=jnp.float32)    # v5e / checks
    tbl_bf16 = make_fm_table(lin_w, emb_w, compute_dtype=jnp.bfloat16)  # v6e / v7x

    def make_x(k, batch):
        cols = []
        for card in feature_fields:
            k, sub = jax.random.split(k)
            cols.append(jax.random.randint(sub, (batch, 1), 0, card, dtype=jnp.int32))
        return jnp.concatenate(cols, axis=1)          # (B, F) int32

    # 1) Small single-tile config (grid == 1), f32 table, strict tolerance.
    x_small = make_x(k_x1, 8)
    y = jax.block_until_ready(fm_forward(x_small, tbl_f32, bias, offsets))
    y_ref = fm_reference(x_small, offsets_arr, lin_w, emb_w, bias)
    assert y.shape == (8,)
    assert jnp.allclose(y, y_ref, atol=1e-5, rtol=1e-5), (y, y_ref)

    # 2) Ragged multi-tile config: 3 tiles of 128, padded last block, no wrapper pad.
    x_mid = make_x(k_x2, 300)
    y2 = jax.block_until_ready(fm_forward(x_mid, tbl_f32, bias, offsets))
    y2_ref = fm_reference(x_mid, offsets_arr, lin_w, emb_w, bias)
    assert y2.shape == (300,)
    assert jnp.allclose(y2, y2_ref, atol=1e-5, rtol=1e-5), (y2, y2_ref)

    # 3) Evenly divided 2-tile config (both v7x TCs), bf16 fast path, loose tolerance.
    x_big = make_x(k_x3, 512)
    y3 = jax.block_until_ready(fm_forward(x_big, tbl_bf16, bias, offsets))
    y3_ref = fm_reference(x_big, offsets_arr, lin_w, emb_w, bias)
    assert y3.shape == (512,)
    assert jnp.allclose(y3, y3_ref, atol=5e-2), (y3, y3_ref)

    print("KERNEL_OK")
</pallas_src>

<mosaic_0001>
module attributes {stable_mosaic.version = 11 : i64} {
  func.func @kernel(%arg0: i32, %arg1: memref<3x8xi32, #tpu.memory_space<vmem>>, %arg2: memref<34x13xf32, #tpu.memory_space<vmem>>, %arg3: memref<1x1xf32, #tpu.memory_space<smem>>, %arg4: memref<1x8xf32, #tpu.memory_space<vmem>>) attributes {dimension_semantics = [#tpu.dimension_semantics<parallel>], iteration_bounds = array<i64: 1>, scalar_prefetch = 0 : i64, scratch_operands = 0 : i64, tpu.core_type = #tpu.core_type<tc>, window_params = [{transform_indices = @transform_0, window_bounds = array<i64: 3, 8>}, {pipeline_mode = #tpu.pipeline_mode<synchronous>, transform_indices = @transform_1, window_bounds = array<i64: 34, 13>}, {transform_indices = @transform_2, window_bounds = array<i64: 1, 1>}, {transform_indices = @transform_3, window_bounds = array<i64: 1, 8>}]} {
    %c0 = arith.constant 0 : index
    %c0_0 = arith.constant 0 : index
    %0 = vector.load %arg1[%c0, %c0_0] : memref<3x8xi32, #tpu.memory_space<vmem>>, vector<3x8xi32>
    %1 = tpu.iota {dimensions = array<i32: 0>} : vector<13x8xi32>
    %2 = vector.extract_strided_slice %0 {offsets = [0, 0], sizes = [1, 8], strides = [1, 1]} : vector<3x8xi32> to vector<1x8xi32>
    %c0_i32 = arith.constant 0 : i32
    %3 = vector.broadcast %c0_i32 : i32 to vector<1x8xi32>
    %4 = arith.addi %2, %3 : vector<1x8xi32>
    %5 = vector.broadcast %4 : vector<1x8xi32> to vector<13x8xi32>
    %6 = arith.cmpi eq, %1, %5 : vector<13x8xi32>
    %7 = vector.extract_strided_slice %0 {offsets = [1, 0], sizes = [1, 8], strides = [1, 1]} : vector<3x8xi32> to vector<1x8xi32>
    %c3_i32 = arith.constant 3 : i32
    %8 = vector.broadcast %c3_i32 : i32 to vector<1x8xi32>
    %9 = arith.addi %7, %8 : vector<1x8xi32>
    %10 = vector.broadcast %9 : vector<1x8xi32> to vector<13x8xi32>
    %11 = arith.cmpi eq, %1, %10 : vector<13x8xi32>
    %12 = arith.ori %6, %11 : vector<13x8xi1>
    %13 = vector.extract_strided_slice %0 {offsets = [2, 0], sizes = [1, 8], strides = [1, 1]} : vector<3x8xi32> to vector<1x8xi32>
    %c7_i32 = arith.constant 7 : i32
    %14 = vector.broadcast %c7_i32 : i32 to vector<1x8xi32>
    %15 = arith.addi %13, %14 : vector<1x8xi32>
    %16 = vector.broadcast %15 : vector<1x8xi32> to vector<13x8xi32>
    %17 = arith.cmpi eq, %1, %16 : vector<13x8xi32>
    %18 = arith.ori %12, %17 : vector<13x8xi1>
    %19 = arith.extui %18 : vector<13x8xi1> to vector<13x8xi32>
    %20 = arith.sitofp %19 : vector<13x8xi32> to vector<13x8xf32>
    %c0_1 = arith.constant 0 : index
    %c0_2 = arith.constant 0 : index
    %21 = vector.load %arg2[%c0_1, %c0_2] : memref<34x13xf32, #tpu.memory_space<vmem>>, vector<34x13xf32>
    %cst = arith.constant dense<0.000000e+00> : vector<34x8xf32>
    %22 = tpu.matmul %21, %20, %cst {dimension_numbers = #tpu.dot_dimension_numbers<[1], [0], [0], [1], [0, 0, 1, 1], [], []>} : vector<34x13xf32>, vector<13x8xf32>, vector<34x8xf32> -> vector<34x8xf32>
    %23 = vector.extract_strided_slice %22 {offsets = [0, 0], sizes = [32, 8], strides = [1, 1]} : vector<34x8xf32> to vector<32x8xf32>
    %24 = vector.extract_strided_slice %22 {offsets = [32, 0], sizes = [1, 8], strides = [1, 1]} : vector<34x8xf32> to vector<1x8xf32>
    %25 = vector.extract_strided_slice %22 {offsets = [33, 0], sizes = [1, 8], strides = [1, 1]} : vector<34x8xf32> to vector<1x8xf32>
    %26 = arith.mulf %23, %23 : vector<32x8xf32>
    %cst_3 = arith.constant dense<0.000000e+00> : vector<8xf32>
    %27 = vector.multi_reduction <add>, %26, %cst_3 [0] : vector<32x8xf32> to vector<8xf32>
    %28 = vector.shape_cast %27 : vector<8xf32> to vector<1x8xf32>
    %29 = arith.subf %28, %24 : vector<1x8xf32>
    %cst_4 = arith.constant 5.000000e-01 : f32
    %30 = vector.broadcast %cst_4 : f32 to vector<1x8xf32>
    %31 = arith.mulf %30, %29 : vector<1x8xf32>
    %32 = arith.addf %25, %31 : vector<1x8xf32>
    %c0_5 = arith.constant 0 : index
    %c0_6 = arith.constant 0 : index
    %33 = memref.load %arg3[%c0_5, %c0_6] : memref<1x1xf32, #tpu.memory_space<smem>>
    %34 = vector.broadcast %33 : f32 to vector<1x8xf32>
    %35 = arith.addf %32, %34 : vector<1x8xf32>
    %36 = arith.negf %35 : vector<1x8xf32>
    %37 = math.exp %36 : vector<1x8xf32>
    %cst_7 = arith.constant 1.000000e+00 : f32
    %38 = vector.broadcast %cst_7 : f32 to vector<1x8xf32>
    %39 = arith.addf %38, %37 : vector<1x8xf32>
    %40 = arith.divf %38, %39 : vector<1x8xf32>
    %c0_8 = arith.constant 0 : index
    %c0_9 = arith.constant 0 : index
    %41 = vector.load %arg4[%c0_8, %c0_9] : memref<1x8xf32, #tpu.memory_space<vmem>>, vector<1x8xf32>
    tpu.vector_store %arg4[%c0_8, %c0_9], %40 {strides = array<i32>} : memref<1x8xf32, #tpu.memory_space<vmem>>, vector<1x8xf32>,
    return
  }
  func.func @transform_0(%arg0: i32) -> (i32, i32) {
    %c0_i32 = arith.constant 0 : i32
    %c0_i32_0 = arith.constant 0 : i32
    return %c0_i32, %arg0 : i32, i32
  }
  func.func @transform_1(%arg0: i32) -> (i32, i32) {
    %c0_i32 = arith.constant 0 : i32
    %c0_i32_0 = arith.constant 0 : i32
    %c0_i32_1 = arith.constant 0 : i32
    return %c0_i32, %c0_i32_0 : i32, i32
  }
  func.func @transform_2(%arg0: i32) -> (i32, i32) {
    %c0_i32 = arith.constant 0 : i32
    %c0_i32_0 = arith.constant 0 : i32
    %c0_i32_1 = arith.constant 0 : i32
    return %c0_i32, %c0_i32_0 : i32, i32
  }
  func.func @transform_3(%arg0: i32) -> (i32, i32) {
    %c0_i32 = arith.constant 0 : i32
    %c0_i32_0 = arith.constant 0 : i32
    return %c0_i32, %arg0 : i32, i32
  }
}

</mosaic_0001>

<llo_original>
// kernel: tpu_custom_call.1
$region0: #{tpu_custom_call.1}
  #allocation0 [shape = 'u32[]', space=smem, size = 0x4, offset = 0x4, fixed_abs, tag = 'smem constant byte address 0x4 - core index']
  #allocation1 [shape = 'u32[144,128]{1,0:T(1,128)}', space=vmem, size = 0x12000, scoped, tag = 'internal scratch']
  #allocation2 [shape = 'f32[1,1]{1,0:T(1,128)S(6)}', space=smem, size = 0x200, scoped, tag = 'scoped memory for tpu_custom_call.1']
  %s0 = inlined_call_operand.vmem [shape: s32[3,8], index: 0, kind: input, shape index: {}]
  %s1 = inlined_call_operand.vmem [shape: f32[34,13], index: 1, kind: input, shape index: {}]
  %s2 = inlined_call_operand.<no memory space> [shape: f32[1,1], index: 2, kind: input, shape index: {}]
  %s3 = inlined_call_operand.hbm [shape: f32[1,8], index: 3, kind: output, shape index: {}]
  %s4 = sld [smem:[#allocation0]]
  $region22: #{tpu_custom_call.1} parent=0
    _
  %s6 = ssub.s32 1, %s4
  %s7 = scalar_select 0, %s6, %s4
  %8 = sst [smem:[#allocation2]] %s2
  $region1: #{tpu_custom_call.1} parent=0
    #allocation3 [shape = 'u8[512]{0}', space=vmem, size = 0x400, scoped, tag = 'output window, operand 0, single buffered']
    #allocation4 [shape = 's32[1]{0}', space=sflag, size = 0x4, scoped, tag = 'scoped memory for tpu_custom_call.1']
    %9 = vsyncpa [#allocation4], 0
    // Predicated region
    $region2: #{tpu_custom_call.1} parent=1 // pred_check
      _
    $region3: #{tpu_custom_call.1} parent=1 // pred_check_branch
      %11 = sbr.rel (0) target = $region5
    $region4: #{tpu_custom_call.1} parent=1 // pred_region
      _
    $region5: #{tpu_custom_call.1} parent=1 // pred_fallthru
      _
    // Predicated region
    $region6: #{tpu_custom_call.1} parent=1 // pred_check
      _
    $region7: #{tpu_custom_call.1} parent=1 // pred_check_branch
      %13 = sbr.rel (0) target = $region9
    $region8: #{tpu_custom_call.1} parent=1 // pred_region
      _
    $region9: #{tpu_custom_call.1} parent=1 // pred_fallthru
      _
    // Predicated region
    $region10: #{tpu_custom_call.1} parent=1 // pred_check
      _
    $region11: #{tpu_custom_call.1} parent=1 // pred_check_branch
      %15 = sbr.rel (0) target = $region13
    $region12: #{tpu_custom_call.1} parent=1 // pred_region
      _
    $region13: #{tpu_custom_call.1} parent=1 // pred_fallthru
      _
    %v16 = vld [vmem:[%s0] sm:$0x7]
    %v17 = vlaneseq
    %v18 = vshrl.u32 %v17, 7
    %v19 = vadd.s32 %v18, 8
    %v20 = vlaneseq
    %v21 = vshrl.u32 %v20, 7
    %v22 = vsub.s32 0, %v21
    %v23 = vrot.slane %v16, %v22
    %vm24 = vcmp.eq.s32.totalorder %v18, %v23
    %vm25 = vcmp.eq.s32.totalorder %v19, %v23
    %v26 = vadd.s32 %v16, 3
    %v27 = vlaneseq
    %v28 = vshrl.u32 %v27, 7
    %v29 = vsub.s32 1, %v28
    %v30 = vrot.slane %v26, %v29
    %vm31 = vcmp.eq.s32.totalorder %v18, %v30
    %vm32 = vcmp.eq.s32.totalorder %v19, %v30
    %vm33 = vmor %vm24, %vm31
    %vm34 = vmor %vm25, %vm32
    %v35 = vadd.s32 %v16, 7
    %v36 = vlaneseq
    %v37 = vshrl.u32 %v36, 7
    %v38 = vsub.s32 2, %v37
    %v39 = vrot.slane %v35, %v38
    %vm40 = vcmp.eq.s32.totalorder %v18, %v39
    %vm41 = vcmp.eq.s32.totalorder %v19, %v39
    %vm42 = vmor %vm33, %vm40
    %vm43 = vmor %vm34, %vm41
    %v44 = vsel %vm42, 1, 0
    %v45 = vsel %vm43, 1, 0
    %v46 = vcvt.s32.f32 %v44
    %v47 = vcvt.s32.f32 %v45
    %v48 = vld [vmem:[%s1] sm:$0xff]
    %v49 = vld [vmem:[%s1 + $0x8] sm:$0xff]
    %v50 = vld [vmem:[%s1 + $0x10] sm:$0xff]
    %v51 = vld [vmem:[%s1 + $0x18] sm:$0xff]
    %v52 = vld [vmem:[%s1 + $0x20] sm:$0x3]
    %vm53 = vcmask 105472
    %v55 = vsel %vm53, %v48, 0
    %v58 = vsel %vm53, %v49, 0
    %v61 = vsel %vm53, %v50, 0
    %v64 = vsel %vm53, %v51, 0
    %v67 = vsel %vm53, %v52, 0
    %vm69 = vcmask 1044480
    %v71 = vsel %vm69, %v47, 0
    %73 = vmatprep.subr.mxu0 0.0
    %74 = vmatpush1.msra.mxu0 0.0
    %75 = vmatprep.subr.mxu0 0.0
    %76 = vmatpush1.msra.mxu0 0.0
    %77 = vmatprep.subr.mxu0 0.0
    %78 = vmatpush1.msra.mxu0 0.0
    %79 = vmatprep.subr.mxu0 0.0
    %80 = vmatpush1.msra.mxu0 0.0
    %81 = vmatprep.subr.mxu0 0.0
    %82 = vmatpush1.msra.mxu0 0.0
    %83 = vmatprep.subr.mxu0 0.0
    %84 = vmatpush1.msra.mxu0 0.0
    %85 = vmatprep.subr.mxu0 0.0
    %86 = vmatpush1.msra.mxu0 0.0
    %87 = vmatprep.subr.mxu0 0.0
    %88 = vmatpush1.msra.mxu0 0.0
    %89 = vmatprep.subr.mxu0 0.0
    %90 = vmatpush1.msra.mxu0 0.0
    %91 = vmatprep.subr.mxu0 0.0
    %92 = vmatpush1.msra.mxu0 0.0
    %93 = vmatprep.subr.mxu0 0.0
    %94 = vmatpush1.msra.mxu0 0.0
    %95 = vmatprep.subr.mxu0 0.0
    %96 = vmatpush1.msra.mxu0 0.0
    %97 = vmatprep.subr.mxu0 0.0
    %98 = vmatpush1.msra.mxu0 0.0
    %99 = vmatprep.subr.mxu0 0.0
    %100 = vmatpush1.msra.mxu0 0.0
    %101 = vmatprep.subr.mxu0 0.0
    %102 = vmatpush1.msra.mxu0 %v71
    %103 = vmatprep.subr.mxu0 0.0
    %104 = vmatpush1.msra.mxu0 %v46
    %105 = vmatprep.subr.mxu0 0.0
    %106 = vmatpush2.msra.mxu0 0.0
    %107 = vmatprep.subr.mxu0 0.0
    %108 = vmatpush2.msra.mxu0 0.0
    %109 = vmatprep.subr.mxu0 0.0
    %110 = vmatpush2.msra.mxu0 0.0
    %111 = vmatprep.subr.mxu0 0.0
    %112 = vmatpush2.msra.mxu0 0.0
    %113 = vmatprep.subr.mxu0 0.0
    %114 = vmatpush2.msra.mxu0 0.0
    %115 = vmatprep.subr.mxu0 0.0
    %116 = vmatpush2.msra.mxu0 0.0
    %117 = vmatprep.subr.mxu0 0.0
    %118 = vmatpush2.msra.mxu0 0.0
    %119 = vmatprep.subr.mxu0 0.0
    %120 = vmatpush2.msra.mxu0 0.0
    %121 = vmatprep.subr.mxu0 0.0
    %122 = vmatpush2.msra.mxu0 0.0
    %123 = vmatprep.subr.mxu0 0.0
    %124 = vmatpush2.msra.mxu0 0.0
    %125 = vmatprep.subr.mxu0 0.0
    %126 = vmatpush2.msra.mxu0 0.0
    %127 = vmatprep.subr.mxu0 0.0
    %128 = vmatpush2.msra.mxu0 0.0
    %129 = vmatprep.subr.mxu0 0.0
    %130 = vmatpush2.msra.mxu0 0.0
    %131 = vmatprep.subr.mxu0 0.0
    %132 = vmatpush2.msra.mxu0 0.0
    %133 = vmatprep.subr.mxu0 0.0
    %134 = vmatpush2.msra.mxu0 0.0
    %135 = vmatprep.subr.mxu0 0.0
    %136 = vmatpush2.msra.mxu0 0.0
    %137 = vmatprep.mubr.f32.mxu0 0.0
    %138 = vmatmul.mubr.f32.gmra.mxu0 %v55
    %v139 = vpop.f32.mrf.mxu0
    %v140 = vadd.f32 0.0, %v139
    %v141 = vpop.f32.mrf.mxu0
    %142 = vmatprep.mubr.f32.mxu0 0.0
    %143 = vmatmul.mubr.f32.gmra.mxu0 %v58
    %v144 = vpop.f32.mrf.mxu0
    %v145 = vadd.f32 0.0, %v144
    %v146 = vpop.f32.mrf.mxu0
    %147 = vmatprep.mubr.f32.mxu0 0.0
    %148 = vmatmul.mubr.f32.gmra.mxu0 %v61
    %v149 = vpop.f32.mrf.mxu0
    %v150 = vadd.f32 0.0, %v149
    %v151 = vpop.f32.mrf.mxu0
    %152 = vmatprep.mubr.f32.mxu0 0.0
    %153 = vmatmul.mubr.f32.gmra.mxu0 %v64
    %v154 = vpop.f32.mrf.mxu0
    %v155 = vadd.f32 0.0, %v154
    %v156 = vpop.f32.mrf.mxu0
    %157 = vmatprep.mubr.f32.mxu0 0.0
    %158 = vmatmul.mubr.f32.gmra.mxu0 %v67
    %v159 = vpop.f32.mrf.mxu0
    %v160 = vadd.f32 0.0, %v159
    %v161 = vpop.f32.mrf.mxu0
    %162 = vdwg.mxu0
    %v163 = vmul.f32 %v140, %v140
    %v164 = vmul.f32 %v145, %v145
    %v165 = vmul.f32 %v150, %v150
    %v166 = vmul.f32 %v155, %v155
    %vm167 = vcmask 64512
    %v168 = vsel %vm167, %v163, 0.0
    %v169 = vsel %vm167, %v164, 0.0
    %v170 = vadd.f32 %v168, %v169
    %v171 = vsel %vm167, %v165, 0.0
    %v172 = vadd.f32 %v170, %v171
    %v173 = vsel %vm167, %v166, 0.0
    %v174 = vadd.f32 %v172, %v173
    %v175 = vrot.slane %v174, 4
    %v176 = vadd.f32 %v174, %v175
    %v177 = vrot.slane %v176, 2
    %v178 = vadd.f32 %v176, %v177
    %v179 = vrot.slane %v178, 1
    %v180 = vadd.f32 %v178, %v179
    %v181 = vsub.f32 %v180, %v160
    %v182 = vmul.f32 %v181, 0.5
    %v184 = vrot.slane %v182, 7
    %v186 = vadd.f32 %v160, %v184
    %s187 = sld [smem:[#allocation2]]
    %v188 = vstv %s187
    %v189 = vadd.f32 %v186, %v188
    %v190 = vxor.u32 %v189, 2147483648
    %v191 = vmul.f32 %v190, 1.442695
    %v192 = vpow.pop %v191
    %v193 = vadd.f32 %v192, 1.0
    %v194 = vrcp.pop %v193
    %v195 = vmul.f32 1.0, %v194
    %vm196 = vcmask 58369
    %197 = vst.msk [vmem:[#allocation3 - $0x1] sm:$0x2] %vm196, %v195
    // Predicated region
    $region14: #{tpu_custom_call.1} parent=1 // pred_check
      _
    $region15: #{tpu_custom_call.1} parent=1 // pred_check_branch
      %199 = sbr.rel (0) target = $region17
    $region16: #{tpu_custom_call.1} parent=1 // pred_region
      %s201 = ssub.s32 16, 16
      %202 = vsyncadd [#allocation4], %s201
      %s204 = sshll.u32 [#allocation3], 4
      %s205 = int_to_ptr.vmem [resolvable:$true] %s204
      %207 = dma.vmem_to_hbm [thread:$0]  %s205, 16, %s3, [#allocation4]
    $region17: #{tpu_custom_call.1} parent=1 // pred_fallthru
      _
    // Predicated region
    $region18: #{tpu_custom_call.1} parent=1 // pred_check
      _
    $region19: #{tpu_custom_call.1} parent=1 // pred_check_branch
      %209 = sbr.rel (0) target = $region21
    $region20: #{tpu_custom_call.1} parent=1 // pred_region
      %210 = dma.done [#allocation4], 16
    $region21: #{tpu_custom_call.1} parent=1 // pred_fallthru
      _
    %211 = vsyncpa [#allocation4], 1

</llo_original>
